<compile_context>
chip_gen: v7x
topology: tpu7x:2x2x1
jax: 0.10.0
libtpu: 0.0.40
codegen_flags: <defaults>
</compile_context>

<pallas_src>
import functools

import jax
import jax.numpy as jnp
from jax.experimental import pallas as pl
from jax.experimental.pallas import tpu as pltpu

# Make wrapper / reference / in-kernel matmuls numerically consistent (f32 passes).
jax.config.update("jax_default_matmul_precision", "highest")

_HI = jax.lax.Precision.HIGHEST


def gat_edge_softmax_kernel(a2_ref, a1t_ref, ft_ref, adj_ref, out_ref,
                            *, num_heads, out_dim, slope):
    """One dst tile of a single GAT layer: LeakyReLU + edge softmax + alpha @ ft.

    a2_ref  : (TD, N_heads=H)  dst attention logits for this dst tile
    a1t_ref : (H, N)           src attention logits, row-oriented (grid-invariant)
    ft_ref  : (N, H*D)         projected src features, heads fused on lanes (invariant)
    adj_ref : (TD, N)  int8    adjacency rows of this dst tile, adj[dst, src]
    out_ref : (TD, H*D)        per-dst-tile output, head-blocks along lanes
    """
    mask = adj_ref[...] != 0                                            # (TD, N) bool
    a2 = a2_ref[...]                                                    # (TD, H)
    a1t = a1t_ref[...]                                                  # (H, N)
    ft = ft_ref[...]                                                    # (N, H*D)

    for h in range(num_heads):
        # e[dst, src] = leaky_relu(a1[src] + a2[dst])
        e = a2[:, h:h + 1] + a1t[h:h + 1, :]                            # (TD, N)
        e = jnp.where(e > 0.0, e, e * slope)                            # LeakyReLU

        # Edge softmax over incoming edges (src axis).  Masked row-max (non-edges pushed
        # to -1e30, exactly like the reference) keeps exp() well-scaled even for large
        # logit spreads; zero-in-degree rows fall through the 1e-20 clamp to exact zeros.
        e = jnp.where(mask, e, -1e30)                                   # (TD, N)
        e_max = jnp.max(e, axis=1, keepdims=True)                       # (TD, 1)
        p = jnp.where(mask, jnp.exp(e - e_max), 0.0)                    # (TD, N)
        denom = jnp.maximum(jnp.sum(p, axis=1, keepdims=True), 1e-20)   # (TD, 1)
        alpha = p / denom

        # Message passing: out[dst] = sum_src alpha[dst, src] * ft[src].
        ft_h = ft[:, h * out_dim:(h + 1) * out_dim]                     # (N, D)
        out_ref[:, h * out_dim:(h + 1) * out_dim] = jnp.dot(
            alpha, ft_h, preferred_element_type=jnp.float32)


def gat_layer_forward(x, fc_w, attn_l, attn_r, adj, *, leaky_relu_alpha=0.2,
                      tile_dst=None):
    """Single GATLayer forward (eval mode, residual=False).

    x: (N, F), fc_w: (F, H*D), attn_l/attn_r: (H, D), adj: (N, N). Returns (N, H, D).
    """
    N, F = x.shape
    H, D = attn_l.shape
    HD = H * D

    # --- grid-invariant precompute, paid once per layer (not per dst tile) -----------
    ft = jnp.dot(x, fc_w, precision=_HI)                          # (N, H*D)
    ft3 = ft.reshape(N, H, D)
    a1t = jnp.einsum("nhd,hd->hn", ft3, attn_l, precision=_HI)    # (H, N) src logits
    a2 = jnp.einsum("nhd,hd->nh", ft3, attn_r, precision=_HI)     # (N, H) dst logits

    # Adjacency streamed as int8: 4x less HBM/VMEM than a dense f32 mask.
    adj_i8 = (adj > 0).astype(jnp.int8)

    # dst-node tiling: adjacency rows, a2 rows and the output are streamed per tile,
    # a1t / ft stay VMEM-resident.  For the toy N this degenerates to grid=(1,).
    if tile_dst is None:
        tile_dst = N if N <= 512 else 256       # 256 is (8,128)/(32,128)-tile friendly
    assert N % tile_dst == 0, "N must be divisible by the dst tile size"
    n_tiles = N // tile_dst

    kernel = functools.partial(
        gat_edge_softmax_kernel, num_heads=H, out_dim=D, slope=float(leaky_relu_alpha))

    out = pl.pallas_call(
        kernel,
        out_shape=jax.ShapeDtypeStruct((N, HD), jnp.float32),
        grid_spec=pl.GridSpec(
            grid=(n_tiles,),
            in_specs=[
                pl.BlockSpec((tile_dst, H), lambda i: (i, 0)),   # a2 rows of this dst tile
                pl.BlockSpec((H, N), lambda i: (0, 0)),          # a1t (grid-invariant)
                pl.BlockSpec((N, HD), lambda i: (0, 0)),         # ft  (grid-invariant)
                pl.BlockSpec((tile_dst, N), lambda i: (i, 0)),   # adj rows (int8 stream)
            ],
            out_specs=pl.BlockSpec((tile_dst, HD), lambda i: (i, 0)),
        ),
        compiler_params=pltpu.CompilerParams(
            dimension_semantics=("parallel",)),   # dst tiles independent (2 TCs on v7x)
    )(a2, a1t, ft, adj_i8)

    # (N, H*D) -> (N, H, D): pure reshape, no transpose pass over HBM.
    return out.reshape(N, H, D)


def gat_forward(layer_params, x, adj, *, leaky_relu_alpha=0.2, inter_act_slope=0.01):
    """Full GAT forward (eval mode): stack of GATLayers, flatten + leaky_relu between
    layers, mean over heads on the last layer (matching GAT.forward)."""
    h = x
    for (fc_w, al, ar) in layer_params[:-1]:
        h = gat_layer_forward(h, fc_w, al, ar, adj, leaky_relu_alpha=leaky_relu_alpha)
        h = h.reshape(h.shape[0], -1)                       # .flatten(1)
        h = jnp.where(h > 0, h, inter_act_slope * h)        # F.leaky_relu (default 0.01)
    fc_w, al, ar = layer_params[-1]
    h = gat_layer_forward(h, fc_w, al, ar, adj, leaky_relu_alpha=leaky_relu_alpha)
    return h.mean(axis=1)                                   # .mean(1) over heads


def gat_layer_reference(x, fc_w, attn_l, attn_r, adj, *, leaky_relu_alpha=0.2):
    """Pure-JAX reference of one GATLayer (eval mode, no dropout)."""
    N = x.shape[0]
    H, D = attn_l.shape
    ft = jnp.dot(x, fc_w, precision=_HI).reshape(N, H, D)
    a1 = jnp.sum(ft * attn_l[None], axis=-1)            # (N, H) src
    a2 = jnp.sum(ft * attn_r[None], axis=-1)            # (N, H) dst
    e = a1[None, :, :] + a2[:, None, :]                  # (dst, src, H)
    e = jnp.where(e > 0, e, leaky_relu_alpha * e)
    e = jnp.where(adj[:, :, None] > 0, e, -1e30)
    e = e - jnp.max(e, axis=1, keepdims=True)
    p = jnp.exp(e) * adj[:, :, None]
    alpha = p / jnp.maximum(jnp.sum(p, axis=1, keepdims=True), 1e-20)
    return jnp.einsum("dsh,shf->dhf", alpha, ft, precision=_HI)


def gat_reference(layer_params, x, adj, *, leaky_relu_alpha=0.2, inter_act_slope=0.01):
    """Pure-JAX reference of the full GAT forward."""
    h = x
    for (fc_w, al, ar) in layer_params[:-1]:
        h = gat_layer_reference(h, fc_w, al, ar, adj, leaky_relu_alpha=leaky_relu_alpha)
        h = h.reshape(h.shape[0], -1)
        h = jnp.where(h > 0, h, inter_act_slope * h)
    fc_w, al, ar = layer_params[-1]
    h = gat_layer_reference(h, fc_w, al, ar, adj, leaky_relu_alpha=leaky_relu_alpha)
    return h.mean(axis=1)


if __name__ == "__main__":
    # Small 2-layer GAT: GATLayer(32 -> 16, heads=2) then GATLayer(32 -> 8, heads=2).
    N = 16
    in_dim, hidden_dim, out_dim = 32, 16, 8
    heads = [2, 2]

    key = jax.random.PRNGKey(0)

    # Deterministic Xavier-normal-style init (gain = 1.414), as in the module's __init__.
    layer_dims = [(in_dim, hidden_dim, heads[0]),
                  (hidden_dim * heads[0], out_dim, heads[1])]
    params = []
    for (fi, fo, hh) in layer_dims:
        key, kw, kl, kr = jax.random.split(key, 4)
        fc_std = 1.414 * (2.0 / (fi + hh * fo)) ** 0.5
        attn_std = 1.414 * (2.0 / (hh + fo)) ** 0.5
        fc_w = fc_std * jax.random.normal(kw, (fi, hh * fo), dtype=jnp.float32)
        al = attn_std * jax.random.normal(kl, (hh, fo), dtype=jnp.float32)
        ar = attn_std * jax.random.normal(kr, (hh, fo), dtype=jnp.float32)
        params.append((fc_w, al, ar))

    key, kx, kadj = jax.random.split(key, 3)
    x = jax.random.normal(kx, (N, in_dim), dtype=jnp.float32)

    # Random directed graph with self-loops, as a dense adjacency mask adj[dst, src].
    adj = (jax.random.uniform(kadj, (N, N)) < 0.3).astype(jnp.float32)
    adj = jnp.maximum(adj, jnp.eye(N, dtype=jnp.float32))

    # Single-layer check (the Pallas kernel itself).
    layer_out = gat_layer_forward(x, *params[0], adj)
    layer_out = jax.block_until_ready(layer_out)
    layer_ref = gat_layer_reference(x, *params[0], adj)
    assert layer_out.shape == (N, heads[0], hidden_dim)
    assert jnp.allclose(layer_out, layer_ref, atol=2e-3, rtol=2e-3), \
        "layer mismatch vs pure-JAX reference"

    # Full-model check.
    out = gat_forward(params, x, adj)
    out = jax.block_until_ready(out)
    ref = gat_reference(params, x, adj)
    assert out.shape == (N, out_dim)
    assert jnp.allclose(out, ref, atol=2e-3, rtol=2e-3), \
        "model mismatch vs pure-JAX reference"

    print("KERNEL_OK")
</pallas_src>

<mosaic_0001>
module attributes {stable_mosaic.version = 11 : i64} {
  func.func @gat_edge_softmax_kernel(%arg0: i32, %arg1: memref<16x2xf32, #tpu.memory_space<vmem>>, %arg2: memref<2x16xf32, #tpu.memory_space<vmem>>, %arg3: memref<16x32xf32, #tpu.memory_space<vmem>>, %arg4: memref<16x16xi8, #tpu.memory_space<vmem>>, %arg5: memref<16x32xf32, #tpu.memory_space<vmem>>) attributes {dimension_semantics = [#tpu.dimension_semantics<parallel>], iteration_bounds = array<i64: 1>, scalar_prefetch = 0 : i64, scratch_operands = 0 : i64, tpu.core_type = #tpu.core_type<tc>, window_params = [{transform_indices = @transform_0, window_bounds = array<i64: 16, 2>}, {pipeline_mode = #tpu.pipeline_mode<synchronous>, transform_indices = @transform_1, window_bounds = array<i64: 2, 16>}, {pipeline_mode = #tpu.pipeline_mode<synchronous>, transform_indices = @transform_2, window_bounds = array<i64: 16, 32>}, {transform_indices = @transform_3, window_bounds = array<i64: 16, 16>}, {transform_indices = @transform_4, window_bounds = array<i64: 16, 32>}]} {
    %c0 = arith.constant 0 : index
    %c0_0 = arith.constant 0 : index
    %0 = vector.load %arg4[%c0, %c0_0] : memref<16x16xi8, #tpu.memory_space<vmem>>, vector<16x16xi8>
    %c0_i8 = arith.constant 0 : i8
    %1 = vector.broadcast %c0_i8 : i8 to vector<16x16xi8>
    %2 = arith.cmpi ne, %0, %1 : vector<16x16xi8>
    %c0_1 = arith.constant 0 : index
    %c0_2 = arith.constant 0 : index
    %3 = vector.load %arg1[%c0_1, %c0_2] : memref<16x2xf32, #tpu.memory_space<vmem>>, vector<16x2xf32>
    %c0_3 = arith.constant 0 : index
    %c0_4 = arith.constant 0 : index
    %4 = vector.load %arg2[%c0_3, %c0_4] : memref<2x16xf32, #tpu.memory_space<vmem>>, vector<2x16xf32>
    %c0_5 = arith.constant 0 : index
    %c0_6 = arith.constant 0 : index
    %5 = vector.load %arg3[%c0_5, %c0_6] : memref<16x32xf32, #tpu.memory_space<vmem>>, vector<16x32xf32>
    %6 = vector.extract_strided_slice %3 {offsets = [0, 0], sizes = [16, 1], strides = [1, 1]} : vector<16x2xf32> to vector<16x1xf32>
    %7 = vector.extract_strided_slice %4 {offsets = [0, 0], sizes = [1, 16], strides = [1, 1]} : vector<2x16xf32> to vector<1x16xf32>
    %8 = vector.broadcast %6 : vector<16x1xf32> to vector<16x16xf32>
    %9 = vector.broadcast %7 : vector<1x16xf32> to vector<16x16xf32>
    %10 = arith.addf %8, %9 : vector<16x16xf32>
    %cst = arith.constant 0.000000e+00 : f32
    %11 = vector.broadcast %cst : f32 to vector<16x16xf32>
    %12 = arith.cmpf ogt, %10, %11 : vector<16x16xf32>
    %cst_7 = arith.constant 2.000000e-01 : f32
    %13 = vector.broadcast %cst_7 : f32 to vector<16x16xf32>
    %14 = arith.mulf %10, %13 : vector<16x16xf32>
    %15 = arith.select %12, %10, %14 : vector<16x16xi1>, vector<16x16xf32>
    %cst_8 = arith.constant -1.000000e+30 : f32
    %16 = vector.broadcast %cst_8 : f32 to vector<16x16xf32>
    %17 = arith.select %2, %15, %16 : vector<16x16xi1>, vector<16x16xf32>
    %cst_9 = arith.constant dense<0xFF800000> : vector<16xf32>
    %18 = vector.multi_reduction <maximumf>, %17, %cst_9 [1] : vector<16x16xf32> to vector<16xf32>
    %19 = vector.shape_cast %18 : vector<16xf32> to vector<16x1xf32>
    %20 = vector.broadcast %19 : vector<16x1xf32> to vector<16x16xf32>
    %21 = arith.subf %17, %20 : vector<16x16xf32>
    %22 = math.exp %21 : vector<16x16xf32>
    %cst_10 = arith.constant 0.000000e+00 : f32
    %23 = vector.broadcast %cst_10 : f32 to vector<16x16xf32>
    %24 = arith.select %2, %22, %23 : vector<16x16xi1>, vector<16x16xf32>
    %cst_11 = arith.constant dense<0.000000e+00> : vector<16xf32>
    %25 = vector.multi_reduction <add>, %24, %cst_11 [1] : vector<16x16xf32> to vector<16xf32>
    %26 = vector.shape_cast %25 : vector<16xf32> to vector<16x1xf32>
    %cst_12 = arith.constant 9.99999968E-21 : f32
    %27 = vector.broadcast %cst_12 : f32 to vector<16x1xf32>
    %28 = arith.maximumf %26, %27 : vector<16x1xf32>
    %29 = vector.broadcast %28 : vector<16x1xf32> to vector<16x16xf32>
    %30 = arith.divf %24, %29 : vector<16x16xf32>
    %31 = vector.extract_strided_slice %5 {offsets = [0, 0], sizes = [16, 16], strides = [1, 1]} : vector<16x32xf32> to vector<16x16xf32>
    %cst_13 = arith.constant dense<0.000000e+00> : vector<16x16xf32>
    %32 = tpu.matmul %30, %31, %cst_13 {dimension_numbers = #tpu.dot_dimension_numbers<[1], [0], [0], [1], [0, 0, 1, 1], [], []>, precision = #tpu.contract_precision<fp32>} : vector<16x16xf32>, vector<16x16xf32>, vector<16x16xf32> -> vector<16x16xf32>
    %c0_14 = arith.constant 0 : index
    %c0_15 = arith.constant 0 : index
    %33 = vector.load %arg5[%c0_14, %c0_15] : memref<16x32xf32, #tpu.memory_space<vmem>>, vector<16x16xf32>
    tpu.vector_store %arg5[%c0_14, %c0_15], %32 {strides = array<i32>} : memref<16x32xf32, #tpu.memory_space<vmem>>, vector<16x16xf32>,
    %34 = vector.extract_strided_slice %3 {offsets = [0, 1], sizes = [16, 1], strides = [1, 1]} : vector<16x2xf32> to vector<16x1xf32>
    %35 = vector.extract_strided_slice %4 {offsets = [1, 0], sizes = [1, 16], strides = [1, 1]} : vector<2x16xf32> to vector<1x16xf32>
    %36 = vector.broadcast %34 : vector<16x1xf32> to vector<16x16xf32>
    %37 = vector.broadcast %35 : vector<1x16xf32> to vector<16x16xf32>
    %38 = arith.addf %36, %37 : vector<16x16xf32>
    %cst_16 = arith.constant 0.000000e+00 : f32
    %39 = vector.broadcast %cst_16 : f32 to vector<16x16xf32>
    %40 = arith.cmpf ogt, %38, %39 : vector<16x16xf32>
    %cst_17 = arith.constant 2.000000e-01 : f32
    %41 = vector.broadcast %cst_17 : f32 to vector<16x16xf32>
    %42 = arith.mulf %38, %41 : vector<16x16xf32>
    %43 = arith.select %40, %38, %42 : vector<16x16xi1>, vector<16x16xf32>
    %cst_18 = arith.constant -1.000000e+30 : f32
    %44 = vector.broadcast %cst_18 : f32 to vector<16x16xf32>
    %45 = arith.select %2, %43, %44 : vector<16x16xi1>, vector<16x16xf32>
    %cst_19 = arith.constant dense<0xFF800000> : vector<16xf32>
    %46 = vector.multi_reduction <maximumf>, %45, %cst_19 [1] : vector<16x16xf32> to vector<16xf32>
    %47 = vector.shape_cast %46 : vector<16xf32> to vector<16x1xf32>
    %48 = vector.broadcast %47 : vector<16x1xf32> to vector<16x16xf32>
    %49 = arith.subf %45, %48 : vector<16x16xf32>
    %50 = math.exp %49 : vector<16x16xf32>
    %cst_20 = arith.constant 0.000000e+00 : f32
    %51 = vector.broadcast %cst_20 : f32 to vector<16x16xf32>
    %52 = arith.select %2, %50, %51 : vector<16x16xi1>, vector<16x16xf32>
    %cst_21 = arith.constant dense<0.000000e+00> : vector<16xf32>
    %53 = vector.multi_reduction <add>, %52, %cst_21 [1] : vector<16x16xf32> to vector<16xf32>
    %54 = vector.shape_cast %53 : vector<16xf32> to vector<16x1xf32>
    %cst_22 = arith.constant 9.99999968E-21 : f32
    %55 = vector.broadcast %cst_22 : f32 to vector<16x1xf32>
    %56 = arith.maximumf %54, %55 : vector<16x1xf32>
    %57 = vector.broadcast %56 : vector<16x1xf32> to vector<16x16xf32>
    %58 = arith.divf %52, %57 : vector<16x16xf32>
    %59 = vector.extract_strided_slice %5 {offsets = [0, 16], sizes = [16, 16], strides = [1, 1]} : vector<16x32xf32> to vector<16x16xf32>
    %cst_23 = arith.constant dense<0.000000e+00> : vector<16x16xf32>
    %60 = tpu.matmul %58, %59, %cst_23 {dimension_numbers = #tpu.dot_dimension_numbers<[1], [0], [0], [1], [0, 0, 1, 1], [], []>, precision = #tpu.contract_precision<fp32>} : vector<16x16xf32>, vector<16x16xf32>, vector<16x16xf32> -> vector<16x16xf32>
    %c0_24 = arith.constant 0 : index
    %c16 = arith.constant 16 : index
    %61 = vector.load %arg5[%c0_24, %c16] : memref<16x32xf32, #tpu.memory_space<vmem>>, vector<16x16xf32>
    tpu.vector_store %arg5[%c0_24, %c16], %60 {strides = array<i32>} : memref<16x32xf32, #tpu.memory_space<vmem>>, vector<16x16xf32>,
    return
  }
  func.func @transform_0(%arg0: i32) -> (i32, i32) {
    %c0_i32 = arith.constant 0 : i32
    %c0_i32_0 = arith.constant 0 : i32
    return %arg0, %c0_i32 : i32, i32
  }
  func.func @transform_1(%arg0: i32) -> (i32, i32) {
    %c0_i32 = arith.constant 0 : i32
    %c0_i32_0 = arith.constant 0 : i32
    %c0_i32_1 = arith.constant 0 : i32
    return %c0_i32, %c0_i32_0 : i32, i32
  }
  func.func @transform_2(%arg0: i32) -> (i32, i32) {
    %c0_i32 = arith.constant 0 : i32
    %c0_i32_0 = arith.constant 0 : i32
    %c0_i32_1 = arith.constant 0 : i32
    return %c0_i32, %c0_i32_0 : i32, i32
  }
  func.func @transform_3(%arg0: i32) -> (i32, i32) {
    %c0_i32 = arith.constant 0 : i32
    %c0_i32_0 = arith.constant 0 : i32
    return %arg0, %c0_i32 : i32, i32
  }
  func.func @transform_4(%arg0: i32) -> (i32, i32) {
    %c0_i32 = arith.constant 0 : i32
    %c0_i32_0 = arith.constant 0 : i32
    return %arg0, %c0_i32 : i32, i32
  }
}

</mosaic_0001>

<llo_original>
// kernel: tpu_custom_call.1
$region0: #{tpu_custom_call.1}
  #allocation0 [shape = 'u32[]', space=smem, size = 0x4, offset = 0x4, fixed_abs, tag = 'smem constant byte address 0x4 - core index']
  #allocation1 [shape = 'u32[144,128]{1,0:T(1,128)}', space=vmem, size = 0x12000, scoped, tag = 'internal scratch']
  %s0 = inlined_call_operand.vmem [shape: f32[16,2], index: 0, kind: input, shape index: {}]
  %s1 = inlined_call_operand.vmem [shape: f32[2,16], index: 1, kind: input, shape index: {}]
  %s2 = inlined_call_operand.vmem [shape: f32[16,32], index: 2, kind: input, shape index: {}]
  %s3 = inlined_call_operand.vmem [shape: s8[16,16], index: 3, kind: input, shape index: {}]
  %s4 = inlined_call_operand.hbm [shape: f32[16,32], index: 4, kind: output, shape index: {}]
  %s5 = sld [smem:[#allocation0]]
  $region26: #{tpu_custom_call.1} parent=0
    _
  %s7 = ssub.s32 1, %s5
  %s8 = scalar_select 0, %s7, %s5
  $region1: #{tpu_custom_call.1} parent=0
    #allocation2 [shape = 'u8[8192]{0}', space=vmem, size = 0x2000, scoped, tag = 'output window, operand 0, single buffered']
    #allocation3 [shape = 's32[1]{0}', space=sflag, size = 0x4, scoped, tag = 'scoped memory for tpu_custom_call.1']
    %9 = vsyncpa [#allocation3], 0
    // Predicated region
    $region2: #{tpu_custom_call.1} parent=1 // pred_check
      _
    $region3: #{tpu_custom_call.1} parent=1 // pred_check_branch
      %11 = sbr.rel (0) target = $region5
    $region4: #{tpu_custom_call.1} parent=1 // pred_region
      _
    $region5: #{tpu_custom_call.1} parent=1 // pred_fallthru
      _
    // Predicated region
    $region6: #{tpu_custom_call.1} parent=1 // pred_check
      _
    $region7: #{tpu_custom_call.1} parent=1 // pred_check_branch
      %13 = sbr.rel (0) target = $region9
    $region8: #{tpu_custom_call.1} parent=1 // pred_region
      _
    $region9: #{tpu_custom_call.1} parent=1 // pred_fallthru
      _
    // Predicated region
    $region10: #{tpu_custom_call.1} parent=1 // pred_check
      _
    $region11: #{tpu_custom_call.1} parent=1 // pred_check_branch
      %15 = sbr.rel (0) target = $region13
    $region12: #{tpu_custom_call.1} parent=1 // pred_region
      _
    $region13: #{tpu_custom_call.1} parent=1 // pred_fallthru
      _
    // Predicated region
    $region14: #{tpu_custom_call.1} parent=1 // pred_check
      _
    $region15: #{tpu_custom_call.1} parent=1 // pred_check_branch
      %17 = sbr.rel (0) target = $region17
    $region16: #{tpu_custom_call.1} parent=1 // pred_region
      _
    $region17: #{tpu_custom_call.1} parent=1 // pred_fallthru
      _
    %v20 = vld [vmem:[%s3] sm:$0x3]
    %v21 = vld [vmem:[%s3 + $0x2] sm:$0x3]
    %vm22 = vnez %v20
    %vm23 = vnez %v21
    %v24 = vld [vmem:[%s0] sm:$0xff]
    %v25 = vld [vmem:[%s0 + $0x8] sm:$0xff]
    %v26 = vld [vmem:[%s1] sm:$0x3]
    %v27 = vld [vmem:[%s2] sm:$0xff]
    %v28 = vld [vmem:[%s2 + $0x8] sm:$0xff]
    %30 = vset.pattern.permute.xlu0 0
    %31 = vperm.xlu0 %30, %v24
    %v32 = vpop.permute.xlu0 %31
    %35 = vset.pattern.permute.xlu0 0
    %36 = vperm.xlu0 %35, %v25
    %v37 = vpop.permute.xlu0 %36
    %v39 = vlaneseq
    %v40 = vshrl.u32 %v39, 7
    %v41 = vsub.s32 0, %v40
    %v42 = vrot.slane %v26, %v41
    %v43 = vadd.f32 %v32, %v42
    %v44 = vadd.f32 %v37, %v42
    %vm45 = vcmp.gt.f32.partialorder %v43, 0.0
    %vm46 = vcmp.gt.f32.partialorder %v44, 0.0
    %v47 = vmul.f32 %v43, 0.2
    %v48 = vmul.f32 %v44, 0.2
    %v49 = vsel %vm45, %v43, %v47
    %v50 = vsel %vm46, %v44, %v48
    %v51 = vsel %vm22, 16843009, 0
    %v52 = vsel %vm23, 16843009, 0
    %v53 = vunpack.c.0.s8 %v51
    %v54 = vunpack.c.0.s8 %v52
    %vm55 = vcmp.ne.s32.totalorder %v53, 0
    %vm56 = vcmp.ne.s32.totalorder %v54, 0
    %v57 = vsel %vm55, %v49, -1e+30
    %v58 = vsel %vm56, %v50, -1e+30
    %vm59 = vcmask 130048
    %v60 = vsel %vm59, %v57, -inf
    %61 = vmax.xlane.f32.xlu0 %v60
    %v62 = vpop.xlane.xlu0 %61
    %v63 = vsel %vm59, %v58, -inf
    %64 = vmax.xlane.f32.xlu0 %v63
    %v65 = vpop.xlane.xlu0 %64
    %v66 = vsub.f32 %v57, %v62
    %v67 = vsub.f32 %v58, %v65
    %v68 = vmul.f32 %v66, 1.442695
    %v69 = vpow.pop %v68
    %v70 = vmul.f32 %v67, 1.442695
    %v71 = vpow.pop %v70
    %v72 = vsel %vm55, %v69, 0.0
    %v73 = vsel %vm56, %v71, 0.0
    %v74 = vsel %vm59, %v72, 0.0
    %75 = vadd.xlane.f32.xlu0 %v74
    %v76 = vpop.xlane.xlu0 %75
    %v77 = vsel %vm59, %v73, 0.0
    %78 = vadd.xlane.f32.xlu0 %v77
    %v79 = vpop.xlane.xlu0 %78
    %v80 = vmax.f32 %v76, 1e-20
    %v81 = vmax.f32 %v79, 1e-20
    %v82 = vrcp.pop %v80
    %v83 = vmul.f32 %v72, %v82
    %v84 = vrcp.pop %v81
    %v85 = vmul.f32 %v73, %v84
    %v87 = vsel %vm59, %v83, 0
    %v90 = vsel %vm59, %v85, 0
    %92 = vmatprep.subr.mxu0 0.0
    %v93 = vand.u32 %v27, 4294901760
    %94 = vmatpush1.msra.mxu0 %v93
    %95 = vmatprep.subr.mxu0 0.0
    %v96 = vand.u32 %v28, 4294901760
    %97 = vmatpush1.msra.mxu0 %v96
    %98 = vmatprep.subr.mxu0 0.0
    %99 = vmatpush1.msra.mxu0 0.0
    %100 = vmatprep.subr.mxu0 0.0
    %101 = vmatpush1.msra.mxu0 0.0
    %102 = vmatprep.subr.mxu0 0.0
    %103 = vmatpush1.msra.mxu0 0.0
    %104 = vmatprep.subr.mxu0 0.0
    %105 = vmatpush1.msra.mxu0 0.0
    %106 = vmatprep.subr.mxu0 0.0
    %107 = vmatpush1.msra.mxu0 0.0
    %108 = vmatprep.subr.mxu0 0.0
    %109 = vmatpush1.msra.mxu0 0.0
    %110 = vmatprep.subr.mxu0 0.0
    %111 = vmatpush1.msra.mxu0 0.0
    %112 = vmatprep.subr.mxu0 0.0
    %113 = vmatpush1.msra.mxu0 0.0
    %114 = vmatprep.subr.mxu0 0.0
    %115 = vmatpush1.msra.mxu0 0.0
    %116 = vmatprep.subr.mxu0 0.0
    %117 = vmatpush1.msra.mxu0 0.0
    %118 = vmatprep.subr.mxu0 0.0
    %119 = vmatpush1.msra.mxu0 0.0
    %120 = vmatprep.subr.mxu0 0.0
    %121 = vmatpush1.msra.mxu0 0.0
    %122 = vmatprep.subr.mxu0 0.0
    %123 = vmatpush1.msra.mxu0 0.0
    %124 = vmatprep.subr.mxu0 0.0
    %125 = vmatpush1.msra.mxu0 0.0
    %126 = vmatprep.subr.mxu0 0.0
    %127 = vmatpush1.msra.mxu0 0.0
    %128 = vmatprep.subr.mxu0 0.0
    %129 = vmatpush1.msra.mxu0 0.0
    %130 = vmatprep.subr.mxu0 0.0
    %131 = vmatpush1.msra.mxu0 0.0
    %132 = vmatprep.subr.mxu0 0.0
    %133 = vmatpush1.msra.mxu0 0.0
    %134 = vmatprep.subr.mxu0 0.0
    %135 = vmatpush1.msra.mxu0 0.0
    %136 = vmatprep.subr.mxu0 0.0
    %137 = vmatpush1.msra.mxu0 0.0
    %138 = vmatprep.subr.mxu0 0.0
    %139 = vmatpush1.msra.mxu0 0.0
    %140 = vmatprep.subr.mxu0 0.0
    %141 = vmatpush1.msra.mxu0 0.0
    %142 = vmatprep.subr.mxu0 0.0
    %143 = vmatpush1.msra.mxu0 0.0
    %144 = vmatprep.subr.mxu0 0.0
    %145 = vmatpush1.msra.mxu0 0.0
    %146 = vmatprep.subr.mxu0 0.0
    %147 = vmatpush1.msra.mxu0 0.0
    %148 = vmatprep.subr.mxu0 0.0
    %149 = vmatpush1.msra.mxu0 0.0
    %150 = vmatprep.subr.mxu0 0.0
    %151 = vmatpush1.msra.mxu0 0.0
    %152 = vmatprep.subr.mxu0 0.0
    %153 = vmatpush1.msra.mxu0 0.0
    %154 = vmatprep.subr.mxu0 0.0
    %155 = vmatpush1.msra.mxu0 0.0
    %156 = vmatprep.subr.mxu0 0.0
    %157 = vmatpush1.msra.mxu0 0.0
    %158 = vmatprep.mubr.f32.mxu0 0.0
    %v159 = vand.u32 %v87, 4294901760
    %v160 = vsub.f32 %v87, %v159
    %v161 = vand.u32 %v160, 4294901760
    %v162 = vsub.f32 %v160, %v161
    %v163 = vand.u32 %v162, 4294901760
    %164 = vmatmul.mubr.f32.gmra.mrb[0].mxu0 %v163
    %v165 = vpop.f32.mrb[0].mxu0
    %v166 = vadd.f32 0.0, %v165
    %v167 = vpop.f32.mrb[0].mxu0
    %168 = vmatprep.mubr.f32.mxu0 0.0
    %v169 = vand.u32 %v90, 4294901760
    %v170 = vsub.f32 %v90, %v169
    %v171 = vand.u32 %v170, 4294901760
    %v172 = vsub.f32 %v170, %v171
    %v173 = vand.u32 %v172, 4294901760
    %174 = vmatmul.mubr.f32.gmra.mrb[0].mxu0 %v173
    %v175 = vpop.f32.mrb[0].mxu0
    %v176 = vadd.f32 0.0, %v175
    %v177 = vpop.f32.mrb[0].mxu0
    %178 = vdwg.mxu0
    %179 = vmatprep.subr.mxu0 0.0
    %v180 = vand.u32 %v27, 4294901760
    %v181 = vsub.f32 %v27, %v180
    %v182 = vand.u32 %v181, 4294901760
    %v183 = vsub.f32 %v181, %v182
    %v184 = vand.u32 %v183, 4294901760
    %185 = vmatpush1.msra.mxu0 %v184
    %186 = vmatprep.subr.mxu0 0.0
    %v187 = vand.u32 %v28, 4294901760
    %v188 = vsub.f32 %v28, %v187
    %v189 = vand.u32 %v188, 4294901760
    %v190 = vsub.f32 %v188, %v189
    %v191 = vand.u32 %v190, 4294901760
    %192 = vmatpush1.msra.mxu0 %v191
    %193 = vmatprep.subr.mxu0 0.0
    %194 = vmatpush1.msra.mxu0 0.0
    %195 = vmatprep.subr.mxu0 0.0
    %196 = vmatpush1.msra.mxu0 0.0
    %197 = vmatprep.subr.mxu0 0.0
    %198 = vmatpush1.msra.mxu0 0.0
    %199 = vmatprep.subr.mxu0 0.0
    %200 = vmatpush1.msra.mxu0 0.0
    %201 = vmatprep.subr.mxu0 0.0
    %202 = vmatpush1.msra.mxu0 0.0
    %203 = vmatprep.subr.mxu0 0.0
    %204 = vmatpush1.msra.mxu0 0.0
    %205 = vmatprep.subr.mxu0 0.0
    %206 = vmatpush1.msra.mxu0 0.0
    %207 = vmatprep.subr.mxu0 0.0
    %208 = vmatpush1.msra.mxu0 0.0
    %209 = vmatprep.subr.mxu0 0.0
    %210 = vmatpush1.msra.mxu0 0.0
    %211 = vmatprep.subr.mxu0 0.0
    %212 = vmatpush1.msra.mxu0 0.0
    %213 = vmatprep.subr.mxu0 0.0
    %214 = vmatpush1.msra.mxu0 0.0
    %215 = vmatprep.subr.mxu0 0.0
    %216 = vmatpush1.msra.mxu0 0.0
    %217 = vmatprep.subr.mxu0 0.0
    %218 = vmatpush1.msra.mxu0 0.0
    %219 = vmatprep.subr.mxu0 0.0
    %220 = vmatpush1.msra.mxu0 0.0
    %221 = vmatprep.subr.mxu0 0.0
    %222 = vmatpush1.msra.mxu0 0.0
    %223 = vmatprep.subr.mxu0 0.0
    %224 = vmatpush1.msra.mxu0 0.0
    %225 = vmatprep.subr.mxu0 0.0
    %226 = vmatpush1.msra.mxu0 0.0
    %227 = vmatprep.subr.mxu0 0.0
    %228 = vmatpush1.msra.mxu0 0.0
    %229 = vmatprep.subr.mxu0 0.0
    %230 = vmatpush1.msra.mxu0 0.0
    %231 = vmatprep.subr.mxu0 0.0
    %232 = vmatpush1.msra.mxu0 0.0
    %233 = vmatprep.subr.mxu0 0.0
    %234 = vmatpush1.msra.mxu0 0.0
    %235 = vmatprep.subr.mxu0 0.0
    %236 = vmatpush1.msra.mxu0 0.0
    %237 = vmatprep.subr.mxu0 0.0
    %238 = vmatpush1.msra.mxu0 0.0
    %239 = vmatprep.subr.mxu0 0.0
    %240 = vmatpush1.msra.mxu0 0.0
    %241 = vmatprep.subr.mxu0 0.0
    %242 = vmatpush1.msra.mxu0 0.0
    %243 = vmatprep.subr.mxu0 0.0
    %244 = vmatpush1.msra.mxu0 0.0
    %245 = vmatprep.subr.mxu0 0.0
    %246 = vmatpush1.msra.mxu0 0.0
    %247 = vmatprep.subr.mxu0 0.0
    %248 = vmatpush1.msra.mxu0 0.0
    %249 = vmatprep.subr.mxu0 0.0
    %250 = vmatpush1.msra.mxu0 0.0
    %251 = vmatprep.subr.mxu0 0.0
    %252 = vmatpush1.msra.mxu0 0.0
    %253 = vmatprep.mubr.f32.mxu0 0.0
    %v254 = vand.u32 %v87, 4294901760
    %255 = vmatmul.mubr.f32.gmra.mrb[0].mxu0 %v254
    %v256 = vpop.f32.mrb[0].mxu0
    %v257 = vadd.f32 %v166, %v256
    %v258 = vpop.f32.mrb[0].mxu0
    %259 = vmatprep.mubr.f32.mxu0 0.0
    %v260 = vand.u32 %v90, 4294901760
    %261 = vmatmul.mubr.f32.gmra.mrb[0].mxu0 %v260
    %v262 = vpop.f32.mrb[0].mxu0
    %v263 = vadd.f32 %v176, %v262
    %v264 = vpop.f32.mrb[0].mxu0
    %265 = vdwg.mxu0
    %266 = vmatprep.subr.mxu0 0.0
    %v267 = vand.u32 %v27, 4294901760
    %v268 = vsub.f32 %v27, %v267
    %269 = vmatpush1.msra.mxu0 %v268
    %270 = vmatprep.subr.mxu0 0.0
    %v271 = vand.u32 %v28, 4294901760
    %v272 = vsub.f32 %v28, %v271
    %273 = vmatpush1.msra.mxu0 %v272
    %274 = vmatprep.subr.mxu0 0.0
    %275 = vmatpush1.msra.mxu0 0.0
    %276 = vmatprep.subr.mxu0 0.0
    %277 = vmatpush1.msra.mxu0 0.0
    %278 = vmatprep.subr.mxu0 0.0
    %279 = vmatpush1.msra.mxu0 0.0
    %280 = vmatprep.subr.mxu0 0.0
    %281 = vmatpush1.msra.mxu0 0.0
    %282 = vmatprep.subr.mxu0 0.0
    %283 = vmatpush1.msra.mxu0 0.0
    %284 = vmatprep.subr.mxu0 0.0
    %285 = vmatpush1.msra.mxu0 0.0
    %286 = vmatprep.subr.mxu0 0.0
    %287 = vmatpush1.msra.mxu0 0.0
    %288 = vmatprep.subr.mxu0 0.0
    %289 = vmatpush1.msra.mxu0 0.0
    %290 = vmatprep.subr.mxu0 0.0
    %291 = vmatpush1.msra.mxu0 0.0
    %292 = vmatprep.subr.mxu0 0.0
    %293 = vmatpush1.msra.mxu0 0.0
    %294 = vmatprep.subr.mxu0 0.0
    %295 = vmatpush1.msra.mxu0 0.0
    %296 = vmatprep.subr.mxu0 0.0
    %297 = vmatpush1.msra.mxu0 0.0
    %298 = vmatprep.subr.mxu0 0.0
    %299 = vmatpush1.msra.mxu0 0.0
    %300 = vmatprep.subr.mxu0 0.0
    %301 = vmatpush1.msra.mxu0 0.0
    %302 = vmatprep.subr.mxu0 0.0
    %303 = vmatpush1.msra.mxu0 0.0
    %304 = vmatprep.subr.mxu0 0.0
    %305 = vmatpush1.msra.mxu0 0.0
    %306 = vmatprep.subr.mxu0 0.0
    %307 = vmatpush1.msra.mxu0 0.0
    %308 = vmatprep.subr.mxu0 0.0
    %309 = vmatpush1.msra.mxu0 0.0
    %310 = vmatprep.subr.mxu0 0.0
    %311 = vmatpush1.msra.mxu0 0.0
    %312 = vmatprep.subr.mxu0 0.0
    %313 = vmatpush1.msra.mxu0 0.0
    %314 = vmatprep.subr.mxu0 0.0
    %315 = vmatpush1.msra.mxu0 0.0
    %316 = vmatprep.subr.mxu0 0.0
    %317 = vmatpush1.msra.mxu0 0.0
    %318 = vmatprep.subr.mxu0 0.0
    %319 = vmatpush1.msra.mxu0 0.0
    %320 = vmatprep.subr.mxu0 0.0
    %321 = vmatpush1.msra.mxu0 0.0
    %322 = vmatprep.subr.mxu0 0.0
    %323 = vmatpush1.msra.mxu0 0.0
    %324 = vmatprep.subr.mxu0 0.0
    %325 = vmatpush1.msra.mxu0 0.0
    %326 = vmatprep.subr.mxu0 0.0
    %327 = vmatpush1.msra.mxu0 0.0
    %328 = vmatprep.subr.mxu0 0.0
    %329 = vmatpush1.msra.mxu0 0.0
    %330 = vmatprep.subr.mxu0 0.0
    %331 = vmatpush1.msra.mxu0 0.0
    %332 = vmatprep.subr.mxu0 0.0
    %333 = vmatpush1.msra.mxu0 0.0
    %334 = vmatprep.mubr.f32.mxu0 0.0
    %v335 = vand.u32 %v87, 4294901760
    %v336 = vsub.f32 %v87, %v335
    %337 = vmatmul.mubr.f32.gmra.mrb[0].mxu0 %v336
    %v338 = vpop.f32.mrb[0].mxu0
    %v339 = vadd.f32 %v257, %v338
    %v340 = vpop.f32.mrb[0].mxu0
    %341 = vmatprep.mubr.f32.mxu0 0.0
    %v342 = vand.u32 %v90, 4294901760
    %v343 = vsub.f32 %v90, %v342
    %344 = vmatmul.mubr.f32.gmra.mrb[0].mxu0 %v343
    %v345 = vpop.f32.mrb[0].mxu0
    %v346 = vadd.f32 %v263, %v345
    %v347 = vpop.f32.mrb[0].mxu0
    %348 = vdwg.mxu0
    %349 = vmatprep.subr.mxu0 0.0
    %v350 = vand.u32 %v27, 4294901760
    %351 = vmatpush1.msra.mxu0 %v350
    %352 = vmatprep.subr.mxu0 0.0
    %v353 = vand.u32 %v28, 4294901760
    %354 = vmatpush1.msra.mxu0 %v353
    %355 = vmatprep.subr.mxu0 0.0
    %356 = vmatpush1.msra.mxu0 0.0
    %357 = vmatprep.subr.mxu0 0.0
    %358 = vmatpush1.msra.mxu0 0.0
    %359 = vmatprep.subr.mxu0 0.0
    %360 = vmatpush1.msra.mxu0 0.0
    %361 = vmatprep.subr.mxu0 0.0
    %362 = vmatpush1.msra.mxu0 0.0
    %363 = vmatprep.subr.mxu0 0.0
    %364 = vmatpush1.msra.mxu0 0.0
    %365 = vmatprep.subr.mxu0 0.0
    %366 = vmatpush1.msra.mxu0 0.0
    %367 = vmatprep.subr.mxu0 0.0
    %368 = vmatpush1.msra.mxu0 0.0
    %369 = vmatprep.subr.mxu0 0.0
    %370 = vmatpush1.msra.mxu0 0.0
    %371 = vmatprep.subr.mxu0 0.0
    %372 = vmatpush1.msra.mxu0 0.0
    %373 = vmatprep.subr.mxu0 0.0
    %374 = vmatpush1.msra.mxu0 0.0
    %375 = vmatprep.subr.mxu0 0.0
    %376 = vmatpush1.msra.mxu0 0.0
    %377 = vmatprep.subr.mxu0 0.0
    %378 = vmatpush1.msra.mxu0 0.0
    %379 = vmatprep.subr.mxu0 0.0
    %380 = vmatpush1.msra.mxu0 0.0
    %381 = vmatprep.subr.mxu0 0.0
    %382 = vmatpush1.msra.mxu0 0.0
    %383 = vmatprep.subr.mxu0 0.0
    %384 = vmatpush1.msra.mxu0 0.0
    %385 = vmatprep.subr.mxu0 0.0
    %386 = vmatpush1.msra.mxu0 0.0
    %387 = vmatprep.subr.mxu0 0.0
    %388 = vmatpush1.msra.mxu0 0.0
    %389 = vmatprep.subr.mxu0 0.0
    %390 = vmatpush1.msra.mxu0 0.0
    %391 = vmatprep.subr.mxu0 0.0
    %392 = vmatpush1.msra.mxu0 0.0
    %393 = vmatprep.subr.mxu0 0.0
    %394 = vmatpush1.msra.mxu0 0.0
    %395 = vmatprep.subr.mxu0 0.0
    %396 = vmatpush1.msra.mxu0 0.0
    %397 = vmatprep.subr.mxu0 0.0
    %398 = vmatpush1.msra.mxu0 0.0
    %399 = vmatprep.subr.mxu0 0.0
    %400 = vmatpush1.msra.mxu0 0.0
    %401 = vmatprep.subr.mxu0 0.0
    %402 = vmatpush1.msra.mxu0 0.0
    %403 = vmatprep.subr.mxu0 0.0
    %404 = vmatpush1.msra.mxu0 0.0
    %405 = vmatprep.subr.mxu0 0.0
    %406 = vmatpush1.msra.mxu0 0.0
    %407 = vmatprep.subr.mxu0 0.0
    %408 = vmatpush1.msra.mxu0 0.0
    %409 = vmatprep.subr.mxu0 0.0
    %410 = vmatpush1.msra.mxu0 0.0
    %411 = vmatprep.subr.mxu0 0.0
    %412 = vmatpush1.msra.mxu0 0.0
    %413 = vmatprep.subr.mxu0 0.0
    %414 = vmatpush1.msra.mxu0 0.0
    %415 = vmatprep.mubr.f32.mxu0 0.0
    %v416 = vand.u32 %v87, 4294901760
    %v417 = vsub.f32 %v87, %v416
    %v418 = vand.u32 %v417, 4294901760
    %419 = vmatmul.mubr.f32.gmra.mrb[0].mxu0 %v418
    %v420 = vpop.f32.mrb[0].mxu0
    %v421 = vadd.f32 %v339, %v420
    %v422 = vpop.f32.mrb[0].mxu0
    %423 = vmatprep.mubr.f32.mxu0 0.0
    %v424 = vand.u32 %v90, 4294901760
    %v425 = vsub.f32 %v90, %v424
    %v426 = vand.u32 %v425, 4294901760
    %427 = vmatmul.mubr.f32.gmra.mrb[0].mxu0 %v426
    %v428 = vpop.f32.mrb[0].mxu0
    %v429 = vadd.f32 %v346, %v428
    %v430 = vpop.f32.mrb[0].mxu0
    %431 = vdwg.mxu0
    %432 = vmatprep.subr.mxu0 0.0
    %v433 = vand.u32 %v27, 4294901760
    %v434 = vsub.f32 %v27, %v433
    %v435 = vand.u32 %v434, 4294901760
    %436 = vmatpush1.msra.mxu0 %v435
    %437 = vmatprep.subr.mxu0 0.0
    %v438 = vand.u32 %v28, 4294901760
    %v439 = vsub.f32 %v28, %v438
    %v440 = vand.u32 %v439, 4294901760
    %441 = vmatpush1.msra.mxu0 %v440
    %442 = vmatprep.subr.mxu0 0.0
    %443 = vmatpush1.msra.mxu0 0.0
    %444 = vmatprep.subr.mxu0 0.0
    %445 = vmatpush1.msra.mxu0 0.0
    %446 = vmatprep.subr.mxu0 0.0
    %447 = vmatpush1.msra.mxu0 0.0
    %448 = vmatprep.subr.mxu0 0.0
    %449 = vmatpush1.msra.mxu0 0.0
    %450 = vmatprep.subr.mxu0 0.0
    %451 = vmatpush1.msra.mxu0 0.0
    %452 = vmatprep.subr.mxu0 0.0
    %453 = vmatpush1.msra.mxu0 0.0
    %454 = vmatprep.subr.mxu0 0.0
    %455 = vmatpush1.msra.mxu0 0.0
    %456 = vmatprep.subr.mxu0 0.0
    %457 = vmatpush1.msra.mxu0 0.0
    %458 = vmatprep.subr.mxu0 0.0
    %459 = vmatpush1.msra.mxu0 0.0
    %460 = vmatprep.subr.mxu0 0.0
    %461 = vmatpush1.msra.mxu0 0.0
    %462 = vmatprep.subr.mxu0 0.0
    %463 = vmatpush1.msra.mxu0 0.0
    %464 = vmatprep.subr.mxu0 0.0
    %465 = vmatpush1.msra.mxu0 0.0
    %466 = vmatprep.subr.mxu0 0.0
    %467 = vmatpush1.msra.mxu0 0.0
    %468 = vmatprep.subr.mxu0 0.0
    %469 = vmatpush1.msra.mxu0 0.0
    %470 = vmatprep.subr.mxu0 0.0
    %471 = vmatpush1.msra.mxu0 0.0
    %472 = vmatprep.subr.mxu0 0.0
    %473 = vmatpush1.msra.mxu0 0.0
    %474 = vmatprep.subr.mxu0 0.0
    %475 = vmatpush1.msra.mxu0 0.0
    %476 = vmatprep.subr.mxu0 0.0
    %477 = vmatpush1.msra.mxu0 0.0
    %478 = vmatprep.subr.mxu0 0.0
    %479 = vmatpush1.msra.mxu0 0.0
    %480 = vmatprep.subr.mxu0 0.0
    %481 = vmatpush1.msra.mxu0 0.0
    %482 = vmatprep.subr.mxu0 0.0
    %483 = vmatpush1.msra.mxu0 0.0
    %484 = vmatprep.subr.mxu0 0.0
    %485 = vmatpush1.msra.mxu0 0.0
    %486 = vmatprep.subr.mxu0 0.0
    %487 = vmatpush1.msra.mxu0 0.0
    %488 = vmatprep.subr.mxu0 0.0
    %489 = vmatpush1.msra.mxu0 0.0
    %490 = vmatprep.subr.mxu0 0.0
    %491 = vmatpush1.msra.mxu0 0.0
    %492 = vmatprep.subr.mxu0 0.0
    %493 = vmatpush1.msra.mxu0 0.0
    %494 = vmatprep.subr.mxu0 0.0
    %495 = vmatpush1.msra.mxu0 0.0
    %496 = vmatprep.subr.mxu0 0.0
    %497 = vmatpush1.msra.mxu0 0.0
    %498 = vmatprep.subr.mxu0 0.0
    %499 = vmatpush1.msra.mxu0 0.0
    %500 = vmatprep.subr.mxu0 0.0
    %501 = vmatpush1.msra.mxu0 0.0
    %502 = vmatprep.mubr.f32.mxu0 0.0
    %v503 = vand.u32 %v87, 4294901760
    %504 = vmatmul.mubr.f32.gmra.mrb[0].mxu0 %v503
    %v505 = vpop.f32.mrb[0].mxu0
    %v506 = vadd.f32 %v421, %v505
    %v507 = vpop.f32.mrb[0].mxu0
    %508 = vmatprep.mubr.f32.mxu0 0.0
    %v509 = vand.u32 %v90, 4294901760
    %510 = vmatmul.mubr.f32.gmra.mrb[0].mxu0 %v509
    %v511 = vpop.f32.mrb[0].mxu0
    %v512 = vadd.f32 %v429, %v511
    %v513 = vpop.f32.mrb[0].mxu0
    %514 = vdwg.mxu0
    %515 = vmatprep.subr.mxu0 0.0
    %v516 = vand.u32 %v27, 4294901760
    %517 = vmatpush1.msra.mxu0 %v516
    %518 = vmatprep.subr.mxu0 0.0
    %v519 = vand.u32 %v28, 4294901760
    %520 = vmatpush1.msra.mxu0 %v519
    %521 = vmatprep.subr.mxu0 0.0
    %522 = vmatpush1.msra.mxu0 0.0
    %523 = vmatprep.subr.mxu0 0.0
    %524 = vmatpush1.msra.mxu0 0.0
    %525 = vmatprep.subr.mxu0 0.0
    %526 = vmatpush1.msra.mxu0 0.0
    %527 = vmatprep.subr.mxu0 0.0
    %528 = vmatpush1.msra.mxu0 0.0
    %529 = vmatprep.subr.mxu0 0.0
    %530 = vmatpush1.msra.mxu0 0.0
    %531 = vmatprep.subr.mxu0 0.0
    %532 = vmatpush1.msra.mxu0 0.0
    %533 = vmatprep.subr.mxu0 0.0
    %534 = vmatpush1.msra.mxu0 0.0
    %535 = vmatprep.subr.mxu0 0.0
    %536 = vmatpush1.msra.mxu0 0.0
    %537 = vmatprep.subr.mxu0 0.0
    %538 = vmatpush1.msra.mxu0 0.0
    %539 = vmatprep.subr.mxu0 0.0
    %540 = vmatpush1.msra.mxu0 0.0
    %541 = vmatprep.subr.mxu0 0.0
    %542 = vmatpush1.msra.mxu0 0.0
    %543 = vmatprep.subr.mxu0 0.0
    %544 = vmatpush1.msra.mxu0 0.0
    %545 = vmatprep.subr.mxu0 0.0
    %546 = vmatpush1.msra.mxu0 0.0
    %547 = vmatprep.subr.mxu0 0.0
    %548 = vmatpush1.msra.mxu0 0.0
    %549 = vmatprep.subr.mxu0 0.0
    %550 = vmatpush1.msra.mxu0 0.0
    %551 = vmatprep.subr.mxu0 0.0
    %552 = vmatpush1.msra.mxu0 0.0
    %553 = vmatprep.subr.mxu0 0.0
    %554 = vmatpush1.msra.mxu0 0.0
    %555 = vmatprep.subr.mxu0 0.0
    %556 = vmatpush1.msra.mxu0 0.0
    %557 = vmatprep.subr.mxu0 0.0
    %558 = vmatpush1.msra.mxu0 0.0
    %559 = vmatprep.subr.mxu0 0.0
    %560 = vmatpush1.msra.mxu0 0.0
    %561 = vmatprep.subr.mxu0 0.0
    %562 = vmatpush1.msra.mxu0 0.0
    %563 = vmatprep.subr.mxu0 0.0
    %564 = vmatpush1.msra.mxu0 0.0
    %565 = vmatprep.subr.mxu0 0.0
    %566 = vmatpush1.msra.mxu0 0.0
    %567 = vmatprep.subr.mxu0 0.0
    %568 = vmatpush1.msra.mxu0 0.0
    %569 = vmatprep.subr.mxu0 0.0
    %570 = vmatpush1.msra.mxu0 0.0
    %571 = vmatprep.subr.mxu0 0.0
    %572 = vmatpush1.msra.mxu0 0.0
    %573 = vmatprep.subr.mxu0 0.0
    %574 = vmatpush1.msra.mxu0 0.0
    %575 = vmatprep.subr.mxu0 0.0
    %576 = vmatpush1.msra.mxu0 0.0
    %577 = vmatprep.subr.mxu0 0.0
    %578 = vmatpush1.msra.mxu0 0.0
    %579 = vmatprep.subr.mxu0 0.0
    %580 = vmatpush1.msra.mxu0 0.0
    %581 = vmatprep.mubr.f32.mxu0 0.0
    %v582 = vand.u32 %v87, 4294901760
    %583 = vmatmul.mubr.f32.gmra.mrb[0].mxu0 %v582
    %v584 = vpop.f32.mrb[0].mxu0
    %v585 = vadd.f32 %v506, %v584
    %v586 = vpop.f32.mrb[0].mxu0
    %587 = vmatprep.mubr.f32.mxu0 0.0
    %v588 = vand.u32 %v90, 4294901760
    %589 = vmatmul.mubr.f32.gmra.mrb[0].mxu0 %v588
    %v590 = vpop.f32.mrb[0].mxu0
    %v591 = vadd.f32 %v512, %v590
    %v592 = vpop.f32.mrb[0].mxu0
    %593 = vdwg.mxu0
    %594 = vst.msk [vmem:[#allocation2] sm:$0xff] %vm59, %v585
    %595 = vst.msk [vmem:[#allocation2 + $0x8] sm:$0xff] %vm59, %v591
    %596 = vset.pattern.permute.xlu0 1
    %597 = vperm.xlu0 %596, %v24
    %v598 = vpop.permute.xlu0 %597
    %600 = vset.pattern.permute.xlu0 1
    %601 = vperm.xlu0 %600, %v25
    %v602 = vpop.permute.xlu0 %601
    %v604 = vlaneseq
    %v605 = vshrl.u32 %v604, 7
    %v606 = vsub.s32 1, %v605
    %v607 = vrot.slane %v26, %v606
    %v608 = vadd.f32 %v598, %v607
    %v609 = vadd.f32 %v602, %v607
    %vm610 = vcmp.gt.f32.partialorder %v608, 0.0
    %vm611 = vcmp.gt.f32.partialorder %v609, 0.0
    %v612 = vmul.f32 %v608, 0.2
    %v613 = vmul.f32 %v609, 0.2
    %v614 = vsel %vm610, %v608, %v612
    %v615 = vsel %vm611, %v609, %v613
    %v616 = vsel %vm55, %v614, -1e+30
    %v617 = vsel %vm56, %v615, -1e+30
    %v618 = vsel %vm59, %v616, -inf
    %619 = vmax.xlane.f32.xlu0 %v618
    %v620 = vpop.xlane.xlu0 %619
    %v621 = vsel %vm59, %v617, -inf
    %622 = vmax.xlane.f32.xlu0 %v621
    %v623 = vpop.xlane.xlu0 %622
    %v624 = vsub.f32 %v616, %v620
    %v625 = vsub.f32 %v617, %v623
    %v626 = vmul.f32 %v624, 1.442695
    %v627 = vpow.pop %v626
    %v628 = vmul.f32 %v625, 1.442695
    %v629 = vpow.pop %v628
    %v630 = vsel %vm55, %v627, 0.0
    %v631 = vsel %vm56, %v629, 0.0
    %v632 = vsel %vm59, %v630, 0.0
    %633 = vadd.xlane.f32.xlu0 %v632
    %v634 = vpop.xlane.xlu0 %633
    %v635 = vsel %vm59, %v631, 0.0
    %636 = vadd.xlane.f32.xlu0 %v635
    %v637 = vpop.xlane.xlu0 %636
    %v638 = vmax.f32 %v634, 1e-20
    %v639 = vmax.f32 %v637, 1e-20
    %v640 = vrcp.pop %v638
    %v641 = vmul.f32 %v630, %v640
    %v642 = vrcp.pop %v639
    %v643 = vmul.f32 %v631, %v642
    %646 = vrot.lane.b32.xlu0 %v27, 112
    %v647 = vpop.permute.xlu0 %646
    %648 = vrot.lane.b32.xlu0 %v28, 112
    %v649 = vpop.permute.xlu0 %648
    %v653 = vsel %vm59, %v641, 0
    %v656 = vsel %vm59, %v643, 0
    %658 = vmatprep.subr.mxu0 0.0
    %v659 = vand.u32 %v647, 4294901760
    %660 = vmatpush1.msra.mxu0 %v659
    %661 = vmatprep.subr.mxu0 0.0
    %v662 = vand.u32 %v649, 4294901760
    %663 = vmatpush1.msra.mxu0 %v662
    %664 = vmatprep.subr.mxu0 0.0
    %665 = vmatpush1.msra.mxu0 0.0
    %666 = vmatprep.subr.mxu0 0.0
    %667 = vmatpush1.msra.mxu0 0.0
    %668 = vmatprep.subr.mxu0 0.0
    %669 = vmatpush1.msra.mxu0 0.0
    %670 = vmatprep.subr.mxu0 0.0
    %671 = vmatpush1.msra.mxu0 0.0
    %672 = vmatprep.subr.mxu0 0.0
    %673 = vmatpush1.msra.mxu0 0.0
    %674 = vmatprep.subr.mxu0 0.0
    %675 = vmatpush1.msra.mxu0 0.0
    %676 = vmatprep.subr.mxu0 0.0
    %677 = vmatpush1.msra.mxu0 0.0
    %678 = vmatprep.subr.mxu0 0.0
    %679 = vmatpush1.msra.mxu0 0.0
    %680 = vmatprep.subr.mxu0 0.0
    %681 = vmatpush1.msra.mxu0 0.0
    %682 = vmatprep.subr.mxu0 0.0
    %683 = vmatpush1.msra.mxu0 0.0
    %684 = vmatprep.subr.mxu0 0.0
    %685 = vmatpush1.msra.mxu0 0.0
    %686 = vmatprep.subr.mxu0 0.0
    %687 = vmatpush1.msra.mxu0 0.0
    %688 = vmatprep.subr.mxu0 0.0
    %689 = vmatpush1.msra.mxu0 0.0
    %690 = vmatprep.subr.mxu0 0.0
    %691 = vmatpush1.msra.mxu0 0.0
    %692 = vmatprep.subr.mxu0 0.0
    %693 = vmatpush1.msra.mxu0 0.0
    %694 = vmatprep.subr.mxu0 0.0
    %695 = vmatpush1.msra.mxu0 0.0
    %696 = vmatprep.subr.mxu0 0.0
    %697 = vmatpush1.msra.mxu0 0.0
    %698 = vmatprep.subr.mxu0 0.0
    %699 = vmatpush1.msra.mxu0 0.0
    %700 = vmatprep.subr.mxu0 0.0
    %701 = vmatpush1.msra.mxu0 0.0
    %702 = vmatprep.subr.mxu0 0.0
    %703 = vmatpush1.msra.mxu0 0.0
    %704 = vmatprep.subr.mxu0 0.0
    %705 = vmatpush1.msra.mxu0 0.0
    %706 = vmatprep.subr.mxu0 0.0
    %707 = vmatpush1.msra.mxu0 0.0
    %708 = vmatprep.subr.mxu0 0.0
    %709 = vmatpush1.msra.mxu0 0.0
    %710 = vmatprep.subr.mxu0 0.0
    %711 = vmatpush1.msra.mxu0 0.0
    %712 = vmatprep.subr.mxu0 0.0
    %713 = vmatpush1.msra.mxu0 0.0
    %714 = vmatprep.subr.mxu0 0.0
    %715 = vmatpush1.msra.mxu0 0.0
    %716 = vmatprep.subr.mxu0 0.0
    %717 = vmatpush1.msra.mxu0 0.0
    %718 = vmatprep.subr.mxu0 0.0
    %719 = vmatpush1.msra.mxu0 0.0
    %720 = vmatprep.subr.mxu0 0.0
    %721 = vmatpush1.msra.mxu0 0.0
    %722 = vmatprep.subr.mxu0 0.0
    %723 = vmatpush1.msra.mxu0 0.0
    %724 = vmatprep.mubr.f32.mxu0 0.0
    %v725 = vand.u32 %v653, 4294901760
    %v726 = vsub.f32 %v653, %v725
    %v727 = vand.u32 %v726, 4294901760
    %v728 = vsub.f32 %v726, %v727
    %v729 = vand.u32 %v728, 4294901760
    %730 = vmatmul.mubr.f32.gmra.mrb[0].mxu0 %v729
    %v731 = vpop.f32.mrb[0].mxu0
    %v732 = vadd.f32 0.0, %v731
    %v733 = vpop.f32.mrb[0].mxu0
    %734 = vmatprep.mubr.f32.mxu0 0.0
    %v735 = vand.u32 %v656, 4294901760
    %v736 = vsub.f32 %v656, %v735
    %v737 = vand.u32 %v736, 4294901760
    %v738 = vsub.f32 %v736, %v737
    %v739 = vand.u32 %v738, 4294901760
    %740 = vmatmul.mubr.f32.gmra.mrb[0].mxu0 %v739
    %v741 = vpop.f32.mrb[0].mxu0
    %v742 = vadd.f32 0.0, %v741
    %v743 = vpop.f32.mrb[0].mxu0
    %744 = vdwg.mxu0
    %745 = vmatprep.subr.mxu0 0.0
    %v746 = vand.u32 %v647, 4294901760
    %v747 = vsub.f32 %v647, %v746
    %v748 = vand.u32 %v747, 4294901760
    %v749 = vsub.f32 %v747, %v748
    %v750 = vand.u32 %v749, 4294901760
    %751 = vmatpush1.msra.mxu0 %v750
    %752 = vmatprep.subr.mxu0 0.0
    %v753 = vand.u32 %v649, 4294901760
    %v754 = vsub.f32 %v649, %v753
    %v755 = vand.u32 %v754, 4294901760
    %v756 = vsub.f32 %v754, %v755
    %v757 = vand.u32 %v756, 4294901760
    %758 = vmatpush1.msra.mxu0 %v757
    %759 = vmatprep.subr.mxu0 0.0
    %760 = vmatpush1.msra.mxu0 0.0
    %761 = vmatprep.subr.mxu0 0.0
    %762 = vmatpush1.msra.mxu0 0.0
    %763 = vmatprep.subr.mxu0 0.0
    %764 = vmatpush1.msra.mxu0 0.0
    %765 = vmatprep.subr.mxu0 0.0
    %766 = vmatpush1.msra.mxu0 0.0
    %767 = vmatprep.subr.mxu0 0.0
    %768 = vmatpush1.msra.mxu0 0.0
    %769 = vmatprep.subr.mxu0 0.0
    %770 = vmatpush1.msra.mxu0 0.0
    %771 = vmatprep.subr.mxu0 0.0
    %772 = vmatpush1.msra.mxu0 0.0
    %773 = vmatprep.subr.mxu0 0.0
    %774 = vmatpush1.msra.mxu0 0.0
    %775 = vmatprep.subr.mxu0 0.0
    %776 = vmatpush1.msra.mxu0 0.0
    %777 = vmatprep.subr.mxu0 0.0
    %778 = vmatpush1.msra.mxu0 0.0
    %779 = vmatprep.subr.mxu0 0.0
    %780 = vmatpush1.msra.mxu0 0.0
    %781 = vmatprep.subr.mxu0 0.0
    %782 = vmatpush1.msra.mxu0 0.0
    %783 = vmatprep.subr.mxu0 0.0
    %784 = vmatpush1.msra.mxu0 0.0
    %785 = vmatprep.subr.mxu0 0.0
    %786 = vmatpush1.msra.mxu0 0.0
    %787 = vmatprep.subr.mxu0 0.0
    %788 = vmatpush1.msra.mxu0 0.0
    %789 = vmatprep.subr.mxu0 0.0
    %790 = vmatpush1.msra.mxu0 0.0
    %791 = vmatprep.subr.mxu0 0.0
    %792 = vmatpush1.msra.mxu0 0.0
    %793 = vmatprep.subr.mxu0 0.0
    %794 = vmatpush1.msra.mxu0 0.0
    %795 = vmatprep.subr.mxu0 0.0
    %796 = vmatpush1.msra.mxu0 0.0
    %797 = vmatprep.subr.mxu0 0.0
    %798 = vmatpush1.msra.mxu0 0.0
    %799 = vmatprep.subr.mxu0 0.0
    %800 = vmatpush1.msra.mxu0 0.0
    %801 = vmatprep.subr.mxu0 0.0
    %802 = vmatpush1.msra.mxu0 0.0
    %803 = vmatprep.subr.mxu0 0.0
    %804 = vmatpush1.msra.mxu0 0.0
    %805 = vmatprep.subr.mxu0 0.0
    %806 = vmatpush1.msra.mxu0 0.0
    %807 = vmatprep.subr.mxu0 0.0
    %808 = vmatpush1.msra.mxu0 0.0
    %809 = vmatprep.subr.mxu0 0.0
    %810 = vmatpush1.msra.mxu0 0.0
    %811 = vmatprep.subr.mxu0 0.0
    %812 = vmatpush1.msra.mxu0 0.0
    %813 = vmatprep.subr.mxu0 0.0
    %814 = vmatpush1.msra.mxu0 0.0
    %815 = vmatprep.subr.mxu0 0.0
    %816 = vmatpush1.msra.mxu0 0.0
    %817 = vmatprep.subr.mxu0 0.0
    %818 = vmatpush1.msra.mxu0 0.0
    %819 = vmatprep.mubr.f32.mxu0 0.0
    %v820 = vand.u32 %v653, 4294901760
    %821 = vmatmul.mubr.f32.gmra.mrb[0].mxu0 %v820
    %v822 = vpop.f32.mrb[0].mxu0
    %v823 = vadd.f32 %v732, %v822
    %v824 = vpop.f32.mrb[0].mxu0
    %825 = vmatprep.mubr.f32.mxu0 0.0
    %v826 = vand.u32 %v656, 4294901760
    %827 = vmatmul.mubr.f32.gmra.mrb[0].mxu0 %v826
    %v828 = vpop.f32.mrb[0].mxu0
    %v829 = vadd.f32 %v742, %v828
    %v830 = vpop.f32.mrb[0].mxu0
    %831 = vdwg.mxu0
    %832 = vmatprep.subr.mxu0 0.0
    %v833 = vand.u32 %v647, 4294901760
    %v834 = vsub.f32 %v647, %v833
    %835 = vmatpush1.msra.mxu0 %v834
    %836 = vmatprep.subr.mxu0 0.0
    %v837 = vand.u32 %v649, 4294901760
    %v838 = vsub.f32 %v649, %v837
    %839 = vmatpush1.msra.mxu0 %v838
    %840 = vmatprep.subr.mxu0 0.0
    %841 = vmatpush1.msra.mxu0 0.0
    %842 = vmatprep.subr.mxu0 0.0
    %843 = vmatpush1.msra.mxu0 0.0
    %844 = vmatprep.subr.mxu0 0.0
    %845 = vmatpush1.msra.mxu0 0.0
    %846 = vmatprep.subr.mxu0 0.0
    %847 = vmatpush1.msra.mxu0 0.0
    %848 = vmatprep.subr.mxu0 0.0
    %849 = vmatpush1.msra.mxu0 0.0
    %850 = vmatprep.subr.mxu0 0.0
    %851 = vmatpush1.msra.mxu0 0.0
    %852 = vmatprep.subr.mxu0 0.0
    %853 = vmatpush1.msra.mxu0 0.0
    %854 = vmatprep.subr.mxu0 0.0
    %855 = vmatpush1.msra.mxu0 0.0
    %856 = vmatprep.subr.mxu0 0.0
    %857 = vmatpush1.msra.mxu0 0.0
    %858 = vmatprep.subr.mxu0 0.0
    %859 = vmatpush1.msra.mxu0 0.0
    %860 = vmatprep.subr.mxu0 0.0
    %861 = vmatpush1.msra.mxu0 0.0
    %862 = vmatprep.subr.mxu0 0.0
    %863 = vmatpush1.msra.mxu0 0.0
    %864 = vmatprep.subr.mxu0 0.0
    %865 = vmatpush1.msra.mxu0 0.0
    %866 = vmatprep.subr.mxu0 0.0
    %867 = vmatpush1.msra.mxu0 0.0
    %868 = vmatprep.subr.mxu0 0.0
    %869 = vmatpush1.msra.mxu0 0.0
    %870 = vmatprep.subr.mxu0 0.0
    %871 = vmatpush1.msra.mxu0 0.0
    %872 = vmatprep.subr.mxu0 0.0
    %873 = vmatpush1.msra.mxu0 0.0
    %874 = vmatprep.subr.mxu0 0.0
    %875 = vmatpush1.msra.mxu0 0.0
    %876 = vmatprep.subr.mxu0 0.0
    %877 = vmatpush1.msra.mxu0 0.0
    %878 = vmatprep.subr.mxu0 0.0
    %879 = vmatpush1.msra.mxu0 0.0
    %880 = vmatprep.subr.mxu0 0.0
    %881 = vmatpush1.msra.mxu0 0.0
    %882 = vmatprep.subr.mxu0 0.0
    %883 = vmatpush1.msra.mxu0 0.0
    %884 = vmatprep.subr.mxu0 0.0
    %885 = vmatpush1.msra.mxu0 0.0
    %886 = vmatprep.subr.mxu0 0.0
    %887 = vmatpush1.msra.mxu0 0.0
    %888 = vmatprep.subr.mxu0 0.0
    %889 = vmatpush1.msra.mxu0 0.0
    %890 = vmatprep.subr.mxu0 0.0
    %891 = vmatpush1.msra.mxu0 0.0
    %892 = vmatprep.subr.mxu0 0.0
    %893 = vmatpush1.msra.mxu0 0.0
    %894 = vmatprep.subr.mxu0 0.0
    %895 = vmatpush1.msra.mxu0 0.0
    %896 = vmatprep.subr.mxu0 0.0
    %897 = vmatpush1.msra.mxu0 0.0
    %898 = vmatprep.subr.mxu0 0.0
    %899 = vmatpush1.msra.mxu0 0.0
    %900 = vmatprep.mubr.f32.mxu0 0.0
    %v901 = vand.u32 %v653, 4294901760
    %v902 = vsub.f32 %v653, %v901
    %903 = vmatmul.mubr.f32.gmra.mrb[0].mxu0 %v902
    %v904 = vpop.f32.mrb[0].mxu0
    %v905 = vadd.f32 %v823, %v904
    %v906 = vpop.f32.mrb[0].mxu0
    %907 = vmatprep.mubr.f32.mxu0 0.0
    %v908 = vand.u32 %v656, 4294901760
    %v909 = vsub.f32 %v656, %v908
    %910 = vmatmul.mubr.f32.gmra.mrb[0].mxu0 %v909
    %v911 = vpop.f32.mrb[0].mxu0
    %v912 = vadd.f32 %v829, %v911
    %v913 = vpop.f32.mrb[0].mxu0
    %914 = vdwg.mxu0
    %915 = vmatprep.subr.mxu0 0.0
    %v916 = vand.u32 %v647, 4294901760
    %917 = vmatpush1.msra.mxu0 %v916
    %918 = vmatprep.subr.mxu0 0.0
    %v919 = vand.u32 %v649, 4294901760
    %920 = vmatpush1.msra.mxu0 %v919
    %921 = vmatprep.subr.mxu0 0.0
    %922 = vmatpush1.msra.mxu0 0.0
    %923 = vmatprep.subr.mxu0 0.0
    %924 = vmatpush1.msra.mxu0 0.0
    %925 = vmatprep.subr.mxu0 0.0
    %926 = vmatpush1.msra.mxu0 0.0
    %927 = vmatprep.subr.mxu0 0.0
    %928 = vmatpush1.msra.mxu0 0.0
    %929 = vmatprep.subr.mxu0 0.0
    %930 = vmatpush1.msra.mxu0 0.0
    %931 = vmatprep.subr.mxu0 0.0
    %932 = vmatpush1.msra.mxu0 0.0
    %933 = vmatprep.subr.mxu0 0.0
    %934 = vmatpush1.msra.mxu0 0.0
    %935 = vmatprep.subr.mxu0 0.0
    %936 = vmatpush1.msra.mxu0 0.0
    %937 = vmatprep.subr.mxu0 0.0
    %938 = vmatpush1.msra.mxu0 0.0
    %939 = vmatprep.subr.mxu0 0.0
    %940 = vmatpush1.msra.mxu0 0.0
    %941 = vmatprep.subr.mxu0 0.0
    %942 = vmatpush1.msra.mxu0 0.0
    %943 = vmatprep.subr.mxu0 0.0
    %944 = vmatpush1.msra.mxu0 0.0
    %945 = vmatprep.subr.mxu0 0.0
    %946 = vmatpush1.msra.mxu0 0.0
    %947 = vmatprep.subr.mxu0 0.0
    %948 = vmatpush1.msra.mxu0 0.0
    %949 = vmatprep.subr.mxu0 0.0
    %950 = vmatpush1.msra.mxu0 0.0
    %951 = vmatprep.subr.mxu0 0.0
    %952 = vmatpush1.msra.mxu0 0.0
    %953 = vmatprep.subr.mxu0 0.0
    %954 = vmatpush1.msra.mxu0 0.0
    %955 = vmatprep.subr.mxu0 0.0
    %956 = vmatpush1.msra.mxu0 0.0
    %957 = vmatprep.subr.mxu0 0.0
    %958 = vmatpush1.msra.mxu0 0.0
    %959 = vmatprep.subr.mxu0 0.0
    %960 = vmatpush1.msra.mxu0 0.0
    %961 = vmatprep.subr.mxu0 0.0
    %962 = vmatpush1.msra.mxu0 0.0
    %963 = vmatprep.subr.mxu0 0.0
    %964 = vmatpush1.msra.mxu0 0.0
    %965 = vmatprep.subr.mxu0 0.0
    %966 = vmatpush1.msra.mxu0 0.0
    %967 = vmatprep.subr.mxu0 0.0
    %968 = vmatpush1.msra.mxu0 0.0
    %969 = vmatprep.subr.mxu0 0.0
    %970 = vmatpush1.msra.mxu0 0.0
    %971 = vmatprep.subr.mxu0 0.0
    %972 = vmatpush1.msra.mxu0 0.0
    %973 = vmatprep.subr.mxu0 0.0
    %974 = vmatpush1.msra.mxu0 0.0
    %975 = vmatprep.subr.mxu0 0.0
    %976 = vmatpush1.msra.mxu0 0.0
    %977 = vmatprep.subr.mxu0 0.0
    %978 = vmatpush1.msra.mxu0 0.0
    %979 = vmatprep.subr.mxu0 0.0
    %980 = vmatpush1.msra.mxu0 0.0
    %981 = vmatprep.mubr.f32.mxu0 0.0
    %v982 = vand.u32 %v653, 4294901760
    %v983 = vsub.f32 %v653, %v982
    %v984 = vand.u32 %v983, 4294901760
    %985 = vmatmul.mubr.f32.gmra.mrb[0].mxu0 %v984
    %v986 = vpop.f32.mrb[0].mxu0
    %v987 = vadd.f32 %v905, %v986
    %v988 = vpop.f32.mrb[0].mxu0
    %989 = vmatprep.mubr.f32.mxu0 0.0
    %v990 = vand.u32 %v656, 4294901760
    %v991 = vsub.f32 %v656, %v990
    %v992 = vand.u32 %v991, 4294901760
    %993 = vmatmul.mubr.f32.gmra.mrb[0].mxu0 %v992
    %v994 = vpop.f32.mrb[0].mxu0
    %v995 = vadd.f32 %v912, %v994
    %v996 = vpop.f32.mrb[0].mxu0
    %997 = vdwg.mxu0
    %998 = vmatprep.subr.mxu0 0.0
    %v999 = vand.u32 %v647, 4294901760
    %v1000 = vsub.f32 %v647, %v999
    %v1001 = vand.u32 %v1000, 4294901760
    %1002 = vmatpush1.msra.mxu0 %v1001
    %1003 = vmatprep.subr.mxu0 0.0
    %v1004 = vand.u32 %v649, 4294901760
    %v1005 = vsub.f32 %v649, %v1004
    %v1006 = vand.u32 %v1005, 4294901760
    %1007 = vmatpush1.msra.mxu0 %v1006
    %1008 = vmatprep.subr.mxu0 0.0
    %1009 = vmatpush1.msra.mxu0 0.0
    %1010 = vmatprep.subr.mxu0 0.0
    %1011 = vmatpush1.msra.mxu0 0.0
    %1012 = vmatprep.subr.mxu0 0.0
    %1013 = vmatpush1.msra.mxu0 0.0
    %1014 = vmatprep.subr.mxu0 0.0
    %1015 = vmatpush1.msra.mxu0 0.0
    %1016 = vmatprep.subr.mxu0 0.0
    %1017 = vmatpush1.msra.mxu0 0.0
    %1018 = vmatprep.subr.mxu0 0.0
    %1019 = vmatpush1.msra.mxu0 0.0
    %1020 = vmatprep.subr.mxu0 0.0
    %1021 = vmatpush1.msra.mxu0 0.0
    %1022 = vmatprep.subr.mxu0 0.0
    %1023 = vmatpush1.msra.mxu0 0.0
    %1024 = vmatprep.subr.mxu0 0.0
    %1025 = vmatpush1.msra.mxu0 0.0
    %1026 = vmatprep.subr.mxu0 0.0
    %1027 = vmatpush1.msra.mxu0 0.0
    %1028 = vmatprep.subr.mxu0 0.0
    %1029 = vmatpush1.msra.mxu0 0.0
    %1030 = vmatprep.subr.mxu0 0.0
    %1031 = vmatpush1.msra.mxu0 0.0
    %1032 = vmatprep.subr.mxu0 0.0
    %1033 = vmatpush1.msra.mxu0 0.0
    %1034 = vmatprep.subr.mxu0 0.0
    %1035 = vmatpush1.msra.mxu0 0.0
    %1036 = vmatprep.subr.mxu0 0.0
    %1037 = vmatpush1.msra.mxu0 0.0
    %1038 = vmatprep.subr.mxu0 0.0
    %1039 = vmatpush1.msra.mxu0 0.0
    %1040 = vmatprep.subr.mxu0 0.0
    %1041 = vmatpush1.msra.mxu0 0.0
    %1042 = vmatprep.subr.mxu0 0.0
    %1043 = vmatpush1.msra.mxu0 0.0
    %1044 = vmatprep.subr.mxu0 0.0
    %1045 = vmatpush1.msra.mxu0 0.0
    %1046 = vmatprep.subr.mxu0 0.0
    %1047 = vmatpush1.msra.mxu0 0.0
    %1048 = vmatprep.subr.mxu0 0.0
    %1049 = vmatpush1.msra.mxu0 0.0
    %1050 = vmatprep.subr.mxu0 0.0
    %1051 = vmatpush1.msra.mxu0 0.0
    %1052 = vmatprep.subr.mxu0 0.0
    %1053 = vmatpush1.msra.mxu0 0.0
    %1054 = vmatprep.subr.mxu0 0.0
    %1055 = vmatpush1.msra.mxu0 0.0
    %1056 = vmatprep.subr.mxu0 0.0
    %1057 = vmatpush1.msra.mxu0 0.0
    %1058 = vmatprep.subr.mxu0 0.0
    %1059 = vmatpush1.msra.mxu0 0.0
    %1060 = vmatprep.subr.mxu0 0.0
    %1061 = vmatpush1.msra.mxu0 0.0
    %1062 = vmatprep.subr.mxu0 0.0
    %1063 = vmatpush1.msra.mxu0 0.0
    %1064 = vmatprep.subr.mxu0 0.0
    %1065 = vmatpush1.msra.mxu0 0.0
    %1066 = vmatprep.subr.mxu0 0.0
    %1067 = vmatpush1.msra.mxu0 0.0
    %1068 = vmatprep.mubr.f32.mxu0 0.0
    %v1069 = vand.u32 %v653, 4294901760
    %1070 = vmatmul.mubr.f32.gmra.mrb[0].mxu0 %v1069
    %v1071 = vpop.f32.mrb[0].mxu0
    %v1072 = vadd.f32 %v987, %v1071
    %v1073 = vpop.f32.mrb[0].mxu0
    %1074 = vmatprep.mubr.f32.mxu0 0.0
    %v1075 = vand.u32 %v656, 4294901760
    %1076 = vmatmul.mubr.f32.gmra.mrb[0].mxu0 %v1075
    %v1077 = vpop.f32.mrb[0].mxu0
    %v1078 = vadd.f32 %v995, %v1077
    %v1079 = vpop.f32.mrb[0].mxu0
    %1080 = vdwg.mxu0
    %1081 = vmatprep.subr.mxu0 0.0
    %v1082 = vand.u32 %v647, 4294901760
    %1083 = vmatpush1.msra.mxu0 %v1082
    %1084 = vmatprep.subr.mxu0 0.0
    %v1085 = vand.u32 %v649, 4294901760
    %1086 = vmatpush1.msra.mxu0 %v1085
    %1087 = vmatprep.subr.mxu0 0.0
    %1088 = vmatpush1.msra.mxu0 0.0
    %1089 = vmatprep.subr.mxu0 0.0
    %1090 = vmatpush1.msra.mxu0 0.0
    %1091 = vmatprep.subr.mxu0 0.0
    %1092 = vmatpush1.msra.mxu0 0.0
    %1093 = vmatprep.subr.mxu0 0.0
    %1094 = vmatpush1.msra.mxu0 0.0
    %1095 = vmatprep.subr.mxu0 0.0
    %1096 = vmatpush1.msra.mxu0 0.0
    %1097 = vmatprep.subr.mxu0 0.0
    %1098 = vmatpush1.msra.mxu0 0.0
    %1099 = vmatprep.subr.mxu0 0.0
    %1100 = vmatpush1.msra.mxu0 0.0
    %1101 = vmatprep.subr.mxu0 0.0
    %1102 = vmatpush1.msra.mxu0 0.0
    %1103 = vmatprep.subr.mxu0 0.0
    %1104 = vmatpush1.msra.mxu0 0.0
    %1105 = vmatprep.subr.mxu0 0.0
    %1106 = vmatpush1.msra.mxu0 0.0
    %1107 = vmatprep.subr.mxu0 0.0
    %1108 = vmatpush1.msra.mxu0 0.0
    %1109 = vmatprep.subr.mxu0 0.0
    %1110 = vmatpush1.msra.mxu0 0.0
    %1111 = vmatprep.subr.mxu0 0.0
    %1112 = vmatpush1.msra.mxu0 0.0
    %1113 = vmatprep.subr.mxu0 0.0
    %1114 = vmatpush1.msra.mxu0 0.0
    %1115 = vmatprep.subr.mxu0 0.0
    %1116 = vmatpush1.msra.mxu0 0.0
    %1117 = vmatprep.subr.mxu0 0.0
    %1118 = vmatpush1.msra.mxu0 0.0
    %1119 = vmatprep.subr.mxu0 0.0
    %1120 = vmatpush1.msra.mxu0 0.0
    %1121 = vmatprep.subr.mxu0 0.0
    %1122 = vmatpush1.msra.mxu0 0.0
    %1123 = vmatprep.subr.mxu0 0.0
    %1124 = vmatpush1.msra.mxu0 0.0
    %1125 = vmatprep.subr.mxu0 0.0
    %1126 = vmatpush1.msra.mxu0 0.0
    %1127 = vmatprep.subr.mxu0 0.0
    %1128 = vmatpush1.msra.mxu0 0.0
    %1129 = vmatprep.subr.mxu0 0.0
    %1130 = vmatpush1.msra.mxu0 0.0
    %1131 = vmatprep.subr.mxu0 0.0
    %1132 = vmatpush1.msra.mxu0 0.0
    %1133 = vmatprep.subr.mxu0 0.0
    %1134 = vmatpush1.msra.mxu0 0.0
    %1135 = vmatprep.subr.mxu0 0.0
    %1136 = vmatpush1.msra.mxu0 0.0
    %1137 = vmatprep.subr.mxu0 0.0
    %1138 = vmatpush1.msra.mxu0 0.0
    %1139 = vmatprep.subr.mxu0 0.0
    %1140 = vmatpush1.msra.mxu0 0.0
    %1141 = vmatprep.subr.mxu0 0.0
    %1142 = vmatpush1.msra.mxu0 0.0
    %1143 = vmatprep.subr.mxu0 0.0
    %1144 = vmatpush1.msra.mxu0 0.0
    %1145 = vmatprep.subr.mxu0 0.0
    %1146 = vmatpush1.msra.mxu0 0.0
    %1147 = vmatprep.mubr.f32.mxu0 0.0
    %v1148 = vand.u32 %v653, 4294901760
    %1149 = vmatmul.mubr.f32.gmra.mrb[0].mxu0 %v1148
    %v1150 = vpop.f32.mrb[0].mxu0
    %v1151 = vadd.f32 %v1072, %v1150
    %v1152 = vpop.f32.mrb[0].mxu0
    %1153 = vmatprep.mubr.f32.mxu0 0.0
    %v1154 = vand.u32 %v656, 4294901760
    %1155 = vmatmul.mubr.f32.gmra.mrb[0].mxu0 %v1154
    %v1156 = vpop.f32.mrb[0].mxu0
    %v1157 = vadd.f32 %v1078, %v1156
    %v1158 = vpop.f32.mrb[0].mxu0
    %1159 = vdwg.mxu0
    %1162 = vrot.lane.b32.xlu0 %v1151, 16
    %v1163 = vpop.permute.xlu0 %1162
    %1164 = vrot.lane.b32.xlu0 %v1157, 16
    %v1165 = vpop.permute.xlu0 %1164
    %vm1168 = vcmask 261248
    %1169 = vst.msk [vmem:[#allocation2] sm:$0xff] %vm1168, %v1163
    %1170 = vst.msk [vmem:[#allocation2 + $0x8] sm:$0xff] %vm1168, %v1165
    // Predicated region
    $region18: #{tpu_custom_call.1} parent=1 // pred_check
      _
    $region19: #{tpu_custom_call.1} parent=1 // pred_check_branch
      %1172 = sbr.rel (0) target = $region21
    $region20: #{tpu_custom_call.1} parent=1 // pred_region
      %s1174 = ssub.s32 256, 256
      %1175 = vsyncadd [#allocation3], %s1174
      %s1176 = sshll.u32 [#allocation2], 4
      %s1177 = int_to_ptr.vmem [resolvable:$true] %s1176
      %1182 = dma.vmem_to_hbm [thread:$0]  %s1177, 256, %s4, [#allocation3], 128, 128, 8
    $region21: #{tpu_custom_call.1} parent=1 // pred_fallthru
      _
    // Predicated region
    $region22: #{tpu_custom_call.1} parent=1 // pred_check
      _
    $region23: #{tpu_custom_call.1} parent=1 // pred_check_branch
      %1184 = sbr.rel (0) target = $region25
    $region24: #{tpu_custom_call.1} parent=1 // pred_region
      %1185 = dma.done [#allocation3], 256
    $region25: #{tpu_custom_call.1} parent=1 // pred_fallthru
      _
    %1186 = vsyncpa [#allocation3], 1

</llo_original>
